<compile_context>
chip_gen: v7x
topology: tpu7x:2x2x1
jax: 0.10.0
libtpu: 0.0.40
codegen_flags: <defaults>
</compile_context>

<pallas_src>
import functools

import jax
import jax.numpy as jnp
from jax.experimental import pallas as pl
from jax.experimental.pallas import tpu as pltpu


# ------------------------------------------------------------------ config ---
class Config:
    input_dim = 4      # conv input channels
    n_codewords = 32   # conv output channels (codewords)
    k = 3              # conv kernel size
    s = 1              # conv stride
    p = 2              # avg-pool window (stride 1)


# ------------------------------------------------------------ fused kernel ---
def lbof_fused_kernel(xs_ref, w_ref, o_ref, *, W, p, HW):
    """Fused conv + abs + L1 norm + AvgPool2d(p, stride=1) for one image.

    Lane-major layout: flattened spatial rows (r = h*W + w) live on lanes,
    codewords live on sublanes.

    xs_ref: [1, k*k*C, HW]  implicit-im2col patches, index (di*k+dj)*C + c
    w_ref : [NC, k*k*C]     conv weight, w[nc, (di*k+dj)*C + c]
    o_ref : [1, NC, HW]     pooled output on flattened rows (lane-dense)
    """
    xs = xs_ref[0]                                   # [KC, HW]
    w = w_ref[...]                                   # [NC, KC]

    # ---- conv: single K = k*k*C contraction on the MXU ----
    conv = jnp.dot(w, xs, preferred_element_type=jnp.float32)      # [NC, HW]

    # ---- abs + L1 normalization over codewords (sublane reduce) ----
    sim = jnp.abs(conv)                                            # VPU
    denom = jnp.sum(sim, axis=0, keepdims=True) + 1e-18            # [1, HW]
    inv = 1.0 / denom                                              # hoisted: one row of divides
    norm = sim * inv                                               # [NC, HW], stays in vregs

    # ---- separable AvgPool2d(p, stride=1) via lane rolls (XLU) + adds (VPU).
    # pltpu.roll(x, HW - off) brings norm[:, r + off] to lane r; the wrapped
    # lanes land at r >= HW - off which never feed a valid output position.
    cols = norm
    for dj in range(1, p):                                         # adjacent columns
        cols = cols + pltpu.roll(norm, shift=HW - dj, axis=1)
    pooled = cols
    for di in range(1, p):                                         # adjacent rows
        pooled = pooled + pltpu.roll(cols, shift=HW - di * W, axis=1)

    o_ref[0] = pooled * jnp.float32(1.0 / (p * p))                 # lane-dense store


# ------------------------------------------------------------------- glue ----
def lbof_forward(x, weight, cfg):
    """x: [B, C, H, W] (NCHW, like PyTorch). weight: [NC, C, k, k]. Returns NCHW."""
    B, C, H, W = x.shape
    NC, Cw, k, _ = weight.shape
    assert Cw == C
    p = cfg.p
    # TODO(synk): only stride-1 conv is supported by the flattened-row fused kernel
    assert cfg.s == 1, "fused LBoF kernel assumes conv stride 1"

    Ho, Wo = H - k + 1, W - k + 1           # conv output spatial size
    Hp, Wp = Ho - p + 1, Wo - p + 1         # pooled output spatial size
    assert Hp >= 1 and Wp >= 1
    HW = H * W
    KC = k * k * C
    pad = (k - 1) * W + (k - 1)             # max row offset read by any conv tap

    # Cheap wrapper prologue: the NCHW flattening needs NO transpose; zero-pad
    # the row axis and stack the k*k shifted slices along K (implicit im2col).
    x_flat = x.astype(jnp.float32).reshape(B, C, HW)
    x_pad = jnp.pad(x_flat, ((0, 0), (0, 0), (0, pad)))            # [B, C, HW+pad]
    taps = [x_pad[:, :, di * W + dj: di * W + dj + HW]
            for di in range(k) for dj in range(k)]
    xs = jnp.concatenate(taps, axis=1)                             # [B, KC, HW]

    # weight [NC, C, k, k] -> [NC, KC] with KC index (di*k + dj)*C + c
    w2 = jnp.transpose(weight.astype(jnp.float32), (0, 2, 3, 1)).reshape(NC, KC)

    pooled_flat = pl.pallas_call(
        functools.partial(lbof_fused_kernel, W=W, p=p, HW=HW),
        out_shape=jax.ShapeDtypeStruct((B, NC, HW), jnp.float32),
        grid_spec=pltpu.PrefetchScalarGridSpec(
            num_scalar_prefetch=0,
            grid=(B,),
            in_specs=[
                pl.BlockSpec((1, KC, HW), lambda b: (b, 0, 0)),
                pl.BlockSpec((NC, KC), lambda b: (0, 0)),
            ],
            out_specs=pl.BlockSpec((1, NC, HW), lambda b: (b, 0, 0)),
        ),
        compiler_params=pltpu.CompilerParams(
            dimension_semantics=("parallel",)),   # both v7x TCs for B >= 2
    )(xs, w2)

    # Valid pooled values live at flattened rows hp*W + wp (hp < Hp, wp < Wp);
    # the kernel output is already NCHW-flattened, so just reshape and crop.
    return pooled_flat.reshape(B, NC, H, W)[:, :, :Hp, :Wp]


# ---------------------------------------------------------------- reference ---
def lbof_reference(x, weight, cfg):
    conv = jax.lax.conv_general_dilated(
        x.astype(jnp.float32), weight.astype(jnp.float32),
        window_strides=(cfg.s, cfg.s), padding="VALID",
        dimension_numbers=("NCHW", "OIHW", "NCHW"))
    sim = jnp.abs(conv)
    normed = sim / (jnp.sum(sim, axis=1, keepdims=True) + 1e-18)
    pooled = jax.lax.reduce_window(
        normed, 0.0, jax.lax.add,
        window_dimensions=(1, 1, cfg.p, cfg.p),
        window_strides=(1, 1, 1, 1), padding="VALID") / (cfg.p * cfg.p)
    return pooled


# -------------------------------------------------------------------- main ---
if __name__ == "__main__":
    cfg = Config()
    key = jax.random.PRNGKey(0)
    kx, kw = jax.random.split(key)

    # input: NCHW, batch=2, channels=input_dim, spatial 16x16
    x = jax.random.normal(kx, (2, cfg.input_dim, 16, 16), dtype=jnp.float32)
    # Conv2d weight: [n_codewords, input_dim, k, k], bias=False
    weight = jax.random.normal(
        kw, (cfg.n_codewords, cfg.input_dim, cfg.k, cfg.k),
        dtype=jnp.float32) * 0.1

    out = lbof_forward(x, weight, cfg)
    out = jax.block_until_ready(out)

    ref = lbof_reference(x, weight, cfg)
    assert out.shape == ref.shape, (out.shape, ref.shape)
    assert jnp.allclose(out, ref, atol=1e-5, rtol=1e-5), float(
        jnp.max(jnp.abs(out - ref)))

    print("KERNEL_OK")
</pallas_src>

<mosaic_0001>
module attributes {stable_mosaic.version = 11 : i64} {
  func.func @lbof_fused_kernel(%arg0: i32, %arg1: memref<1x36x256xf32, #tpu.memory_space<vmem>>, %arg2: memref<32x36xf32, #tpu.memory_space<vmem>>, %arg3: memref<1x32x256xf32, #tpu.memory_space<vmem>>) attributes {dimension_semantics = [#tpu.dimension_semantics<parallel>], iteration_bounds = array<i64: 2>, scalar_prefetch = 0 : i64, scratch_operands = 0 : i64, tpu.core_type = #tpu.core_type<tc>, window_params = [{transform_indices = @transform_0, window_bounds = array<i64: 1, 36, 256>}, {pipeline_mode = #tpu.pipeline_mode<synchronous>, transform_indices = @transform_1, window_bounds = array<i64: 32, 36>}, {transform_indices = @transform_2, window_bounds = array<i64: 1, 32, 256>}]} {
    %c0 = arith.constant 0 : index
    %c0_0 = arith.constant 0 : index
    %c0_1 = arith.constant 0 : index
    %0 = vector.load %arg1[%c0, %c0_0, %c0_1] : memref<1x36x256xf32, #tpu.memory_space<vmem>>, vector<1x36x256xf32>
    %1 = vector.shape_cast %0 : vector<1x36x256xf32> to vector<36x256xf32>
    %c0_2 = arith.constant 0 : index
    %c0_3 = arith.constant 0 : index
    %2 = vector.load %arg2[%c0_2, %c0_3] : memref<32x36xf32, #tpu.memory_space<vmem>>, vector<32x36xf32>
    %cst = arith.constant dense<0.000000e+00> : vector<32x256xf32>
    %3 = tpu.matmul %2, %1, %cst {dimension_numbers = #tpu.dot_dimension_numbers<[1], [0], [0], [1], [0, 0, 1, 1], [], []>} : vector<32x36xf32>, vector<36x256xf32>, vector<32x256xf32> -> vector<32x256xf32>
    %4 = math.absf %3 : vector<32x256xf32>
    %cst_4 = arith.constant dense<0.000000e+00> : vector<256xf32>
    %5 = vector.multi_reduction <add>, %4, %cst_4 [0] : vector<32x256xf32> to vector<256xf32>
    %6 = vector.shape_cast %5 : vector<256xf32> to vector<1x256xf32>
    %cst_5 = arith.constant 1.000000e-18 : f32
    %7 = vector.broadcast %cst_5 : f32 to vector<1x256xf32>
    %8 = arith.addf %6, %7 : vector<1x256xf32>
    %cst_6 = arith.constant 1.000000e+00 : f32
    %9 = vector.broadcast %cst_6 : f32 to vector<1x256xf32>
    %10 = arith.divf %9, %8 : vector<1x256xf32>
    %11 = vector.broadcast %10 : vector<1x256xf32> to vector<32x256xf32>
    %12 = arith.mulf %4, %11 : vector<32x256xf32>
    %c255_i32 = arith.constant 255 : i32
    %13 = tpu.dynamic_rotate %12 by %c255_i32 dim 1 : vector<32x256xf32>, i32 -> vector<32x256xf32>
    %14 = arith.addf %12, %13 : vector<32x256xf32>
    %c240_i32 = arith.constant 240 : i32
    %15 = tpu.dynamic_rotate %14 by %c240_i32 dim 1 : vector<32x256xf32>, i32 -> vector<32x256xf32>
    %16 = arith.addf %14, %15 : vector<32x256xf32>
    %cst_7 = arith.constant 2.500000e-01 : f32
    %17 = vector.broadcast %cst_7 : f32 to vector<32x256xf32>
    %18 = arith.mulf %16, %17 : vector<32x256xf32>
    %c0_8 = arith.constant 0 : index
    %c0_9 = arith.constant 0 : index
    %c0_10 = arith.constant 0 : index
    %19 = vector.load %arg3[%c0_8, %c0_9, %c0_10] : memref<1x32x256xf32, #tpu.memory_space<vmem>>, vector<1x32x256xf32>
    %20 = vector.shape_cast %19 : vector<1x32x256xf32> to vector<32x256xf32>
    %21 = vector.shape_cast %18 : vector<32x256xf32> to vector<1x32x256xf32>
    tpu.vector_store %arg3[%c0_8, %c0_9, %c0_10], %21 {strides = array<i32>} : memref<1x32x256xf32, #tpu.memory_space<vmem>>, vector<1x32x256xf32>,
    return
  }
  func.func @transform_0(%arg0: i32) -> (i32, i32, i32) {
    %c0_i32 = arith.constant 0 : i32
    %c0_i32_0 = arith.constant 0 : i32
    %c0_i32_1 = arith.constant 0 : i32
    return %arg0, %c0_i32, %c0_i32_0 : i32, i32, i32
  }
  func.func @transform_1(%arg0: i32) -> (i32, i32) {
    %c0_i32 = arith.constant 0 : i32
    %c0_i32_0 = arith.constant 0 : i32
    %c0_i32_1 = arith.constant 0 : i32
    return %c0_i32, %c0_i32_0 : i32, i32
  }
  func.func @transform_2(%arg0: i32) -> (i32, i32, i32) {
    %c0_i32 = arith.constant 0 : i32
    %c0_i32_0 = arith.constant 0 : i32
    %c0_i32_1 = arith.constant 0 : i32
    return %arg0, %c0_i32, %c0_i32_0 : i32, i32, i32
  }
}

</mosaic_0001>

<llo_original>
// kernel: tpu_custom_call.1
$region0: #{tpu_custom_call.1}
  #allocation0 [shape = 'u32[]', space=smem, size = 0x4, offset = 0x4, fixed_abs, tag = 'smem constant byte address 0x4 - core index']
  #allocation1 [shape = 'u32[144,128]{1,0:T(1,128)}', space=vmem, size = 0x12000, scoped, tag = 'internal scratch']
  %s0 = inlined_call_operand.vmem [shape: f32[2,36,256], index: 0, kind: input, shape index: {}]
  %s1 = inlined_call_operand.vmem [shape: f32[32,36], index: 1, kind: input, shape index: {}]
  %s2 = inlined_call_operand.hbm [shape: f32[2,32,256], index: 2, kind: output, shape index: {}]
  %s3 = sld [smem:[#allocation0]]
  $region41: #{tpu_custom_call.1} parent=0
    _
  %s5 = ssub.s32 1, %s3
  %s6 = scalar_select 0, %s5, %s3
  $region1: #{tpu_custom_call.1} parent=0
    #allocation2 [shape = 'u8[65536]{0}', space=vmem, size = 0x10000, scoped, tag = 'output window, operand 0']
    #allocation3 [shape = 's32[2]{0}', space=sflag, size = 0x8, scoped, tag = 'scoped memory for tpu_custom_call.1']
    %7 = vsyncpa [#allocation3], 0
    %s8 = scalar_lea.sflag [#allocation3], 1
    %9 = vsyncpa %s8, 0
    loop: start=0, step=1, limit=4
    $region2: #{tpu_custom_call.1} parent=1 // loop_pre_header
      _
    $region3: #{tpu_custom_call.1} parent=1 // loop_header
      %s11 = sphi 0, %s15
      %p12 = scmp.ge.s32.totalorder %s11, 4
      %s21 = sphi 0, %s23
      %s24 = sphi 0, %s21
      %s25 = sphi 0, %s24
      %s41 = sphi 0, %s25
      %s45 = sphi 0, %s45
      %s47 = sphi 0, %s45
      %s48 = sphi 0, %s47
      %s62 = sphi 0, %s48
      %s68 = sphi 0, %s70
      %s71 = sphi 0, %s68
      %s72 = sphi 0, %s71
      %s88 = sphi 0, %s72
    $region4: #{tpu_custom_call.1} parent=1 // loop_header_branch
      %14 = sbr.rel (%p12) target = $region8
    $region5: #{tpu_custom_call.1} parent=1 // loop_body
      %s16 = ssub.s32 %s11, 1
      %s17 = ssub.s32 %s11, 2
      %s18 = sadd.s32 %s11, 1
      %s19 = ssub.s32 %s11, %s18
      %p20 = scmp.eq.s32.totalorder %s19, 0
      %s22 = sadd.s32 %s21, 1
      %s23 = scalar_select %p20, %s21, %s22
      %p26 = pneg %p20
      %p27 = scmp.eq.s32.totalorder %s11, 1
      %p28 = por %p26, %p27
      %p29 = scmp.ne.s32.totalorder %s21, %s24
      %p30 = scmp.eq.s32.totalorder %s11, 0
      %p31 = por %p29, %p30
      %p32 = scmp.ne.s32.totalorder %s21, %s24
      %p33 = scmp.eq.s32.totalorder %s16, 1
      %p34 = por %p32, %p33
      %p35 = scmp.ne.s32.totalorder %s24, %s25
      %p36 = scmp.eq.s32.totalorder %s16, 0
      %p37 = por %p35, %p36
      %p38 = scmp.ne.s32.totalorder %s24, %s25
      %p39 = scmp.eq.s32.totalorder %s17, 1
      %p40 = por %p38, %p39
      %p42 = scmp.ne.s32.totalorder %s25, %s41
      %p43 = scmp.eq.s32.totalorder %s17, 0
      %p44 = por %p42, %p43
      %s46 = sadd.s32 %s45, 1
      %p49 = scmp.eq.s32.totalorder %s11, 1
      %p50 = scmp.ne.s32.totalorder %s45, %s47
      %p51 = scmp.eq.s32.totalorder %s11, 0
      %p52 = por %p50, %p51
      %p53 = scmp.ne.s32.totalorder %s45, %s47
      %p54 = scmp.eq.s32.totalorder %s16, 1
      %p55 = por %p53, %p54
      %p56 = scmp.ne.s32.totalorder %s47, %s48
      %p57 = scmp.eq.s32.totalorder %s16, 0
      %p58 = por %p56, %p57
      %p59 = scmp.ne.s32.totalorder %s47, %s48
      %p60 = scmp.eq.s32.totalorder %s17, 1
      %p61 = por %p59, %p60
      %p63 = scmp.ne.s32.totalorder %s48, %s62
      %p64 = scmp.eq.s32.totalorder %s17, 0
      %p65 = por %p63, %p64
      %s66 = ssub.s32 %s11, %s18
      %p67 = scmp.eq.s32.totalorder %s66, 0
      %s69 = sadd.s32 %s68, 1
      %s70 = scalar_select %p67, %s68, %s69
      %p73 = pneg %p67
      %p74 = scmp.eq.s32.totalorder %s11, 1
      %p75 = por %p73, %p74
      %p76 = scmp.ne.s32.totalorder %s68, %s71
      %p77 = scmp.eq.s32.totalorder %s11, 0
      %p78 = por %p76, %p77
      %p79 = scmp.ne.s32.totalorder %s68, %s71
      %p80 = scmp.eq.s32.totalorder %s16, 1
      %p81 = por %p79, %p80
      %p82 = scmp.ne.s32.totalorder %s71, %s72
      %p83 = scmp.eq.s32.totalorder %s16, 0
      %p84 = por %p82, %p83
      %p85 = scmp.ne.s32.totalorder %s71, %s72
      %p86 = scmp.eq.s32.totalorder %s17, 1
      %p87 = por %p85, %p86
      %p89 = scmp.ne.s32.totalorder %s72, %s88
      %p90 = scmp.eq.s32.totalorder %s17, 0
      %p91 = por %p89, %p90
      %p92 = scmp.le.s32.totalorder 1, %s11
      %p93 = scmp.lt.s32.totalorder %s11, 3
      %p94 = pnand %p92, %p93
      %p95 = pneg %p94
      // Predicated region
      $region9: #{tpu_custom_call.1} parent=5 // pred_check
        _
      $region10: #{tpu_custom_call.1} parent=5 // pred_check_branch
        %97 = sbr.rel (%p94) target = $region12
      $region11: #{tpu_custom_call.1} parent=5 // pred_region
        %s98 = ssub.s32 %s11, 1
        // Predicated region
        $region13: #{tpu_custom_call.1} parent=11 // pred_check
          %p99 = pneg %p58
        $region14: #{tpu_custom_call.1} parent=11 // pred_check_branch
          %101 = sbr.rel (%p99) target = $region16
        $region15: #{tpu_custom_call.1} parent=11 // pred_region
          _
        $region16: #{tpu_custom_call.1} parent=11 // pred_fallthru
          _
      $region12: #{tpu_custom_call.1} parent=5 // pred_fallthru
        _
      %p102 = scmp.lt.s32.totalorder %s11, 2
      // Predicated region
      $region17: #{tpu_custom_call.1} parent=5 // pred_check
        %p103 = pneg %p102
      $region18: #{tpu_custom_call.1} parent=5 // pred_check_branch
        %105 = sbr.rel (%p103) target = $region20
      $region19: #{tpu_custom_call.1} parent=5 // pred_region
        // Predicated region
        $region21: #{tpu_custom_call.1} parent=19 // pred_check
          %p106 = pneg %p31
        $region22: #{tpu_custom_call.1} parent=19 // pred_check_branch
          %108 = sbr.rel (%p106) target = $region24
        $region23: #{tpu_custom_call.1} parent=19 // pred_region
          %p109 = scmp.lt.s32.totalorder %s11, 1
          %s110 = scalar_select %p109, %s11, 1
          %s111 = smul.addr %s110, 10
          %s112 = smul.addr %s111, 8
          %s113 = scalar_lea.vmem %s0, %s112
        $region24: #{tpu_custom_call.1} parent=19 // pred_fallthru
          _
      $region20: #{tpu_custom_call.1} parent=5 // pred_fallthru
        _
      %p114 = scmp.le.s32.totalorder 1, %s11
      %p115 = scmp.lt.s32.totalorder %s11, 3
      %p116 = pnand %p114, %p115
      %p117 = pneg %p116
      // Predicated region
      $region25: #{tpu_custom_call.1} parent=5 // pred_check
        _
      $region26: #{tpu_custom_call.1} parent=5 // pred_check_branch
        %119 = sbr.rel (%p116) target = $region28
      $region27: #{tpu_custom_call.1} parent=5 // pred_region
        %s120 = ssub.s32 %s11, 1
        %p121 = scmp.lt.s32.totalorder %s16, 1
        %s122 = scalar_select %p121, %s16, 1
        %s123 = smul.addr %s122, 10
        %s124 = smul.addr %s123, 8
        %s125 = scalar_lea.vmem %s0, %s124
        %p126 = pneg %p37
        %p127 = pneg %p34
        %p128 = pneg %p58
        %p129 = pneg %p55
        %p130 = pneg %p84
        %p131 = pneg %p81
        %s132 = sand.u32 %s71, 1
        %s133 = scalar_lea.sflag [#allocation3], %s132
        %s134 = sand.u32 %s71, 1
        %s135 = smul.addr %s134, 64
        %s136 = scalar_lea.vmem [#allocation2], %s135
        %p137 = scmp.lt.s32.totalorder %s16, 1
        %s138 = scalar_select %p137, %s16, 1
        %s139 = smul.addr %s138, 10
        %s140 = smul.addr %s139, 8
        %s141 = scalar_lea.vmem %s0, %s140
        %v142 = vld [vmem:[%s141] sm:$0xff]
        %v143 = vld [vmem:[%s141 + $0x8] sm:$0xff]
        %v144 = vld [vmem:[%s141 + $0x10] sm:$0xff]
        %v145 = vld [vmem:[%s141 + $0x18] sm:$0xff]
        %v146 = vld [vmem:[%s141 + $0x20] sm:$0xff]
        %v147 = vld [vmem:[%s141 + $0x28] sm:$0xff]
        %v148 = vld [vmem:[%s141 + $0x30] sm:$0xff]
        %v149 = vld [vmem:[%s141 + $0x38] sm:$0xff]
        %v150 = vld [vmem:[%s141 + $0x40] sm:$0xf]
        %v151 = vld [vmem:[%s141 + $0x48] sm:$0xf]
        %v152 = vld [vmem:[%s1] sm:$0xff]
        %v153 = vld [vmem:[%s1 + $0x8] sm:$0xff]
        %v154 = vld [vmem:[%s1 + $0x10] sm:$0xff]
        %v155 = vld [vmem:[%s1 + $0x18] sm:$0xff]
        %vm156 = vcmask 293888
        %v158 = vsel %vm156, %v152, 0
        %v161 = vsel %vm156, %v153, 0
        %v164 = vsel %vm156, %v154, 0
        %v167 = vsel %vm156, %v155, 0
        %vm169 = vcmask 1043456
        %v171 = vsel %vm169, %v150, 0
        %v174 = vsel %vm169, %v151, 0
        %176 = vmatprep.subr.mxu0 %v143
        %177 = vmatpush1.msra.mxu0 %v142
        %178 = vmatprep.subr.mxu0 %v145
        %179 = vmatpush1.msra.mxu0 %v144
        %180 = vmatprep.subr.mxu0 %v147
        %181 = vmatpush1.msra.mxu0 %v146
        %182 = vmatprep.subr.mxu0 %v149
        %183 = vmatpush1.msra.mxu0 %v148
        %184 = vmatprep.subr.mxu0 %v174
        %185 = vmatpush1.msra.mxu0 %v171
        %186 = vmatprep.subr.mxu0 0.0
        %187 = vmatpush1.msra.mxu0 0.0
        %188 = vmatprep.subr.mxu0 0.0
        %189 = vmatpush1.msra.mxu0 0.0
        %190 = vmatprep.subr.mxu0 0.0
        %191 = vmatpush1.msra.mxu0 0.0
        %192 = vmatprep.subr.mxu0 0.0
        %193 = vmatpush1.msra.mxu0 0.0
        %194 = vmatprep.subr.mxu0 0.0
        %195 = vmatpush1.msra.mxu0 0.0
        %196 = vmatprep.subr.mxu0 0.0
        %197 = vmatpush1.msra.mxu0 0.0
        %198 = vmatprep.subr.mxu0 0.0
        %199 = vmatpush1.msra.mxu0 0.0
        %200 = vmatprep.subr.mxu0 0.0
        %201 = vmatpush1.msra.mxu0 0.0
        %202 = vmatprep.subr.mxu0 0.0
        %203 = vmatpush1.msra.mxu0 0.0
        %204 = vmatprep.subr.mxu0 0.0
        %205 = vmatpush1.msra.mxu0 0.0
        %206 = vmatprep.subr.mxu0 0.0
        %207 = vmatpush1.msra.mxu0 0.0
        %208 = vmatprep.subr.mxu0 0.0
        %209 = vmatpush1.msra.mxu0 0.0
        %210 = vmatprep.subr.mxu0 0.0
        %211 = vmatpush1.msra.mxu0 0.0
        %212 = vmatprep.subr.mxu0 0.0
        %213 = vmatpush1.msra.mxu0 0.0
        %214 = vmatprep.subr.mxu0 0.0
        %215 = vmatpush1.msra.mxu0 0.0
        %216 = vmatprep.subr.mxu0 0.0
        %217 = vmatpush1.msra.mxu0 0.0
        %218 = vmatprep.subr.mxu0 0.0
        %219 = vmatpush1.msra.mxu0 0.0
        %220 = vmatprep.subr.mxu0 0.0
        %221 = vmatpush1.msra.mxu0 0.0
        %222 = vmatprep.subr.mxu0 0.0
        %223 = vmatpush1.msra.mxu0 0.0
        %224 = vmatprep.subr.mxu0 0.0
        %225 = vmatpush1.msra.mxu0 0.0
        %226 = vmatprep.subr.mxu0 0.0
        %227 = vmatpush1.msra.mxu0 0.0
        %228 = vmatprep.subr.mxu0 0.0
        %229 = vmatpush1.msra.mxu0 0.0
        %230 = vmatprep.subr.mxu0 0.0
        %231 = vmatpush1.msra.mxu0 0.0
        %232 = vmatprep.subr.mxu0 0.0
        %233 = vmatpush1.msra.mxu0 0.0
        %234 = vmatprep.subr.mxu0 0.0
        %235 = vmatpush1.msra.mxu0 0.0
        %236 = vmatprep.subr.mxu0 0.0
        %237 = vmatpush1.msra.mxu0 0.0
        %238 = vmatprep.subr.mxu0 0.0
        %239 = vmatpush1.msra.mxu0 0.0
        %240 = vmatprep.mubr.f32.mxu0 0.0
        %241 = vmatmul.mubr.f32.gmra.mrb[0].mxu0 %v158
        %v242 = vpop.f32.mrb[0].mxu0
        %v243 = vadd.f32 0.0, %v242
        %v244 = vpop.f32.mrb[0].mxu0
        %v245 = vadd.f32 0.0, %v244
        %246 = vmatprep.mubr.f32.mxu0 0.0
        %247 = vmatmul.mubr.f32.gmra.mrb[0].mxu0 %v161
        %v248 = vpop.f32.mrb[0].mxu0
        %v249 = vadd.f32 0.0, %v248
        %v250 = vpop.f32.mrb[0].mxu0
        %v251 = vadd.f32 0.0, %v250
        %252 = vmatprep.mubr.f32.mxu0 0.0
        %253 = vmatmul.mubr.f32.gmra.mrb[0].mxu0 %v164
        %v254 = vpop.f32.mrb[0].mxu0
        %v255 = vadd.f32 0.0, %v254
        %v256 = vpop.f32.mrb[0].mxu0
        %v257 = vadd.f32 0.0, %v256
        %258 = vmatprep.mubr.f32.mxu0 0.0
        %259 = vmatmul.mubr.f32.gmra.mrb[0].mxu0 %v167
        %v260 = vpop.f32.mrb[0].mxu0
        %v261 = vadd.f32 0.0, %v260
        %v262 = vpop.f32.mrb[0].mxu0
        %v263 = vadd.f32 0.0, %v262
        %264 = vdwg.mxu0
        %v265 = vand.u32 2147483647, %v243
        %v266 = vand.u32 2147483647, %v245
        %v267 = vand.u32 2147483647, %v249
        %v268 = vand.u32 2147483647, %v251
        %v269 = vand.u32 2147483647, %v255
        %v270 = vand.u32 2147483647, %v257
        %v271 = vand.u32 2147483647, %v261
        %v272 = vand.u32 2147483647, %v263
        %v273 = vadd.f32 %v265, %v267
        %v274 = vadd.f32 %v273, %v269
        %v275 = vadd.f32 %v274, %v271
        %v276 = vrot.slane %v275, 4
        %v277 = vadd.f32 %v275, %v276
        %v278 = vrot.slane %v277, 2
        %v279 = vadd.f32 %v277, %v278
        %v280 = vrot.slane %v279, 1
        %v281 = vadd.f32 %v279, %v280
        %v282 = vadd.f32 %v266, %v268
        %v283 = vadd.f32 %v282, %v270
        %v284 = vadd.f32 %v283, %v272
        %v285 = vrot.slane %v284, 4
        %v286 = vadd.f32 %v284, %v285
        %v287 = vrot.slane %v286, 2
        %v288 = vadd.f32 %v286, %v287
        %v289 = vrot.slane %v288, 1
        %v290 = vadd.f32 %v288, %v289
        %v291 = vadd.f32 %v281, 1e-18
        %v292 = vadd.f32 %v290, 1e-18
        %v293 = vrcp.pop %v291
        %v294 = vmul.f32 1.0, %v293
        %v295 = vrcp.pop %v292
        %v296 = vmul.f32 1.0, %v295
        %v297 = vmul.f32 %v265, %v294
        %v298 = vmul.f32 %v266, %v296
        %v299 = vmul.f32 %v267, %v294
        %v300 = vmul.f32 %v268, %v296
        %v301 = vmul.f32 %v269, %v294
        %v302 = vmul.f32 %v270, %v296
        %v303 = vmul.f32 %v271, %v294
        %v304 = vmul.f32 %v272, %v296
        %305 = vrot.lane.b32.xlu0 %v297, 127
        %v306 = vpop.permute.xlu0 %305
        %307 = vrot.lane.b32.xlu0 %v299, 127
        %v308 = vpop.permute.xlu0 %307
        %309 = vrot.lane.b32.xlu0 %v301, 127
        %v310 = vpop.permute.xlu0 %309
        %311 = vrot.lane.b32.xlu0 %v303, 127
        %v312 = vpop.permute.xlu0 %311
        %313 = vrot.lane.b32.xlu0 %v298, 127
        %v314 = vpop.permute.xlu0 %313
        %315 = vrot.lane.b32.xlu0 %v300, 127
        %v316 = vpop.permute.xlu0 %315
        %317 = vrot.lane.b32.xlu0 %v302, 127
        %v318 = vpop.permute.xlu0 %317
        %319 = vrot.lane.b32.xlu0 %v304, 127
        %v320 = vpop.permute.xlu0 %319
        %v321 = vlaneseq
        %v322 = vand.u32 %v321, 127
        %vm323 = vcmp.lt.s32.totalorder %v322, 127
        %v324 = vsel %vm323, %v306, %v314
        %v325 = vsel %vm323, %v308, %v316
        %v326 = vsel %vm323, %v310, %v318
        %v327 = vsel %vm323, %v312, %v320
        %v328 = vsel %vm323, %v314, %v306
        %v329 = vsel %vm323, %v316, %v308
        %v330 = vsel %vm323, %v318, %v310
        %v331 = vsel %vm323, %v320, %v312
        %v332 = vadd.f32 %v297, %v324
        %v333 = vadd.f32 %v298, %v328
        %v334 = vadd.f32 %v299, %v325
        %v335 = vadd.f32 %v300, %v329
        %v336 = vadd.f32 %v301, %v326
        %v337 = vadd.f32 %v302, %v330
        %v338 = vadd.f32 %v303, %v327
        %v339 = vadd.f32 %v304, %v331
        %340 = vrot.lane.b32.xlu0 %v332, 112
        %v341 = vpop.permute.xlu0 %340
        %342 = vrot.lane.b32.xlu0 %v334, 112
        %v343 = vpop.permute.xlu0 %342
        %344 = vrot.lane.b32.xlu0 %v336, 112
        %v345 = vpop.permute.xlu0 %344
        %346 = vrot.lane.b32.xlu0 %v338, 112
        %v347 = vpop.permute.xlu0 %346
        %348 = vrot.lane.b32.xlu0 %v333, 112
        %v349 = vpop.permute.xlu0 %348
        %350 = vrot.lane.b32.xlu0 %v335, 112
        %v351 = vpop.permute.xlu0 %350
        %352 = vrot.lane.b32.xlu0 %v337, 112
        %v353 = vpop.permute.xlu0 %352
        %354 = vrot.lane.b32.xlu0 %v339, 112
        %v355 = vpop.permute.xlu0 %354
        %vm356 = vcmp.lt.s32.totalorder %v322, 112
        %v357 = vsel %vm356, %v341, %v349
        %v358 = vsel %vm356, %v343, %v351
        %v359 = vsel %vm356, %v345, %v353
        %v360 = vsel %vm356, %v347, %v355
        %v361 = vsel %vm356, %v349, %v341
        %v362 = vsel %vm356, %v351, %v343
        %v363 = vsel %vm356, %v353, %v345
        %v364 = vsel %vm356, %v355, %v347
        %v365 = vadd.f32 %v332, %v357
        %v366 = vadd.f32 %v333, %v361
        %v367 = vadd.f32 %v334, %v358
        %v368 = vadd.f32 %v335, %v362
        %v369 = vadd.f32 %v336, %v359
        %v370 = vadd.f32 %v337, %v363
        %v371 = vadd.f32 %v338, %v360
        %v372 = vadd.f32 %v339, %v364
        %v373 = vmul.f32 %v365, 0.25
        %v374 = vmul.f32 %v366, 0.25
        %v375 = vmul.f32 %v367, 0.25
        %v376 = vmul.f32 %v368, 0.25
        %v377 = vmul.f32 %v369, 0.25
        %v378 = vmul.f32 %v370, 0.25
        %v379 = vmul.f32 %v371, 0.25
        %v380 = vmul.f32 %v372, 0.25
        %381 = vst [vmem:[%s136] sm:$0xff] %v373
        %382 = vst [vmem:[%s136 + $0x8] sm:$0xff] %v374
        %383 = vst [vmem:[%s136 + $0x10] sm:$0xff] %v375
        %384 = vst [vmem:[%s136 + $0x18] sm:$0xff] %v376
        %385 = vst [vmem:[%s136 + $0x20] sm:$0xff] %v377
        %386 = vst [vmem:[%s136 + $0x28] sm:$0xff] %v378
        %387 = vst [vmem:[%s136 + $0x30] sm:$0xff] %v379
        %388 = vst [vmem:[%s136 + $0x38] sm:$0xff] %v380
        %s389 = sand.u32 %s71, 1
        %s390 = scalar_lea.sflag [#allocation3], %s389
        %s391 = sand.u32 %s71, 1
        %s392 = smul.addr %s391, 64
        %s393 = scalar_lea.vmem [#allocation2], %s392
        // Predicated region
        $region29: #{tpu_custom_call.1} parent=27 // pred_check
          %p394 = pneg %p81
        $region30: #{tpu_custom_call.1} parent=27 // pred_check_branch
          %396 = sbr.rel (%p394) target = $region32
        $region31: #{tpu_custom_call.1} parent=27 // pred_region
          %s398 = ssub.s32 1024, 1024
          %399 = vsyncadd %s390, %s398
          %s400 = smul.addr %s16, 8
          %s401 = smul.addr %s400, 128
          %s402 = scalar_lea.hbm %s2, %s401
          %s403 = sshll.u32 %s393, 4
          %s404 = int_to_ptr.vmem [resolvable:$true] %s403
          %409 = dma.vmem_to_hbm [thread:$0]  %s404, 1024, %s402, %s390, 256, 256, 16
        $region32: #{tpu_custom_call.1} parent=27 // pred_fallthru
          _
      $region28: #{tpu_custom_call.1} parent=5 // pred_fallthru
        _
      %p410 = scmp.le.s32.totalorder 2, %s11
      // Predicated region
      $region33: #{tpu_custom_call.1} parent=5 // pred_check
        %p411 = pneg %p410
      $region34: #{tpu_custom_call.1} parent=5 // pred_check_branch
        %413 = sbr.rel (%p411) target = $region36
      $region35: #{tpu_custom_call.1} parent=5 // pred_region
        %s414 = ssub.s32 %s11, 2
        // Predicated region
        $region37: #{tpu_custom_call.1} parent=35 // pred_check
          %p415 = pneg %p87
        $region38: #{tpu_custom_call.1} parent=35 // pred_check_branch
          %417 = sbr.rel (%p415) target = $region40
        $region39: #{tpu_custom_call.1} parent=35 // pred_region
          %s418 = sand.u32 %s72, 1
          %s419 = scalar_lea.sflag [#allocation3], %s418
          %s420 = sand.u32 %s72, 1
          %s421 = smul.addr %s420, 64
          %s422 = scalar_lea.vmem [#allocation2], %s421
          %423 = dma.done %s419, 1024
        $region40: #{tpu_custom_call.1} parent=35 // pred_fallthru
          _
      $region36: #{tpu_custom_call.1} parent=5 // pred_fallthru
        _
    $region6: #{tpu_custom_call.1} parent=1 // loop_footer
      %s15 = sadd.s32 1, %s11
    $region7: #{tpu_custom_call.1} parent=1 // loop_footer_branch
      %10 = sbr.rel target = $region3
    $region8: #{tpu_custom_call.1} parent=1 // loop_exit
      _
    %424 = vsyncpa [#allocation3], 1
    %s425 = scalar_lea.sflag [#allocation3], 1
    %426 = vsyncpa %s425, 1

</llo_original>
